<compile_context>
chip_gen: v7x
topology: tpu7x:2x2x1
jax: 0.10.0
libtpu: 0.0.40
codegen_flags: <defaults>
</compile_context>

<pallas_src>
import functools

import jax
import jax.numpy as jnp
from jax.experimental import pallas as pl
from jax.experimental.pallas import tpu as pltpu

_F32_MIN = float(jnp.finfo(jnp.float32).min)


def _round_up(x, m):
    return (x + m - 1) // m * m


def _round_down(x, m):
    return (x // m) * m


def _full_softmax_kernel(full_ref, out_ref, m_ref, l_ref, *, vocab, num_k):
    # full_ref: VMEM [ROW_TILE, V_TILE]   (native dtype, e.g. bf16)
    # out_ref : VMEM [ROW_TILE, 128]      f32 per-lane lse partial (written at last k)
    # m_ref   : VMEM [ROW_TILE, 128]      f32 running per-lane max
    # l_ref   : VMEM [ROW_TILE, 128]      f32 running per-lane sum of exp(x - m)
    row_tile, v_tile = full_ref.shape
    n_col = v_tile // 128
    k = pl.program_id(1)

    @pl.when(k == 0)
    def _init():
        # Most-negative *finite* f32 (not -inf) so alpha = exp(m_old - m_new)
        # can never hit 0*inf = nan on the first chunk.
        m_ref[...] = jnp.full_like(m_ref, _F32_MIN)
        l_ref[...] = jnp.zeros_like(l_ref)

    # Static per-128-lane-column decision: can this column block ever run past
    # the true vocab?  (Only possible in the last V chunk; harmless all-True
    # compare+select in earlier chunks.)
    masked_cols = frozenset(
        c for c in range(n_col)
        if (num_k - 1) * v_tile + (c + 1) * 128 > vocab)
    if masked_cols:
        lane = jax.lax.broadcasted_iota(jnp.int32, (row_tile, 128), 1)
        col0 = k * v_tile  # first global column index of this V chunk

    def load_col(c):
        # 128-lane-aligned static slice of the VMEM block: whole-vreg selects,
        # no relayout.  The HBM->VMEM DMA happened once per block; reading the
        # slab twice (max pass + exp pass) only costs VMEM bandwidth.
        blk = full_ref[:, c * 128:(c + 1) * 128].astype(jnp.float32)
        if c in masked_cols:
            # Mask out-of-vocab lanes to -inf BEFORE both the max and the exp-sum.
            blk = jnp.where(lane + (col0 + c * 128) < vocab, blk,
                            jnp.float32(-jnp.inf))
        return blk

    # Pass 1: per-lane running max (pure VPU, no cross-lane XLU reduce).
    m_old = m_ref[...]
    m_new = m_old
    for c in range(n_col):
        m_new = jnp.maximum(m_new, load_col(c))

    # Guard against +inf entries: subtract a finite reference point so the sum
    # cleanly overflows to +inf (matching torch.logsumexp).  m can never be
    # -inf thanks to the finite init.
    m_new_safe = jnp.where(jnp.isfinite(m_new), m_new, jnp.float32(0.0))
    m_old_safe = jnp.where(jnp.isfinite(m_old), m_old, jnp.float32(0.0))
    alpha = jnp.exp(m_old_safe - m_new_safe)

    # Pass 2: per-lane exp-sum against the updated per-lane max (VPU + EUP).
    s = jnp.zeros((row_tile, 128), jnp.float32)
    for c in range(n_col):
        s = s + jnp.exp(load_col(c) - m_new_safe)

    l_ref[...] = l_ref[...] * alpha + s
    m_ref[...] = m_new

    @pl.when(k == num_k - 1)
    def _finalize():
        # Per-lane lse partial; the 128-lane combine happens in the wrapper.
        # Untouched lanes: _F32_MIN + log(0) = -inf (contributes 0 later).
        # +inf lanes: 0 + log(inf) = +inf.  NaN propagates.
        m_fin = m_ref[...]
        m_fin_safe = jnp.where(jnp.isfinite(m_fin), m_fin, jnp.float32(0.0))
        out_ref[...] = m_fin_safe + jnp.log(l_ref[...])


def _choose_tiles(num_rows, vocab, itemsize):
    """Generation-aware tile sizes + scoped-VMEM limit.

    v5e/v6e: 128 MiB VMEM -> ~21 MiB per double-buffered input block.
    v7x    :  64 MiB VMEM -> ~10 MiB per block (don't blow the smaller card).
    """
    try:
        vmem_cap = int(pltpu.get_tpu_info().vmem_capacity_bytes)
    except Exception:
        vmem_cap = 64 * 1024 * 1024          # v7x-safe fallback
    per_buffer = min(max(vmem_cap // 6, 2 * 1024 * 1024), 24 * 1024 * 1024)
    vmem_limit = min(vmem_cap * 7 // 10, 64 * 1024 * 1024)

    v_full = _round_up(vocab, 128)
    if 8 * v_full * itemsize <= per_buffer:
        v_tile = v_full                       # whole vocab per chunk (no rescale)
    else:
        v_tile = max(128, _round_down(per_buffer // (8 * itemsize), 128))

    rows_per_budget = max(8, per_buffer // (v_tile * itemsize))
    row_tile = max(8, _round_down(min(rows_per_budget, 1024), 8))
    row_tile = min(row_tile, _round_up(num_rows, 8))
    # v7x has 2 TensorCores and the row axis is the only "parallel" grid dim:
    # make sure there are at least 2 row tiles whenever there is enough work.
    if num_rows > 8:
        row_tile = min(row_tile, _round_up(pl.cdiv(num_rows, 2), 8))
    return row_tile, v_tile, vmem_limit


def _full_in_spec(row_tile, v_tile, extra_buffering):
    index_map = lambda i, k: (i, k)
    if extra_buffering:
        try:
            # 3-deep buffering hides DMA latency when per-step blocks are small.
            return pl.BlockSpec((row_tile, v_tile), index_map,
                                pipeline_mode=pl.Buffered(3))
        except Exception:
            pass  # older BlockSpec without pipeline_mode: fall back to default
    return pl.BlockSpec((row_tile, v_tile), index_map)


def full_softmax_loss(pos_score, full_score, temperature=1.0, *,
                      row_tile=None, v_tile=None):
    # TODO(synk): `temperature` is stored but never used in the PyTorch forward;
    # kept only for signature parity.
    assert full_score.ndim == pos_score.ndim + 1, \
        "expects full_score = pos_score dims + vocab"
    *batch_dims, vocab = full_score.shape
    num_rows = 1
    for d in batch_dims:
        num_rows *= d

    # Flatten to [rows, vocab]; keep the native dtype (e.g. bf16) so the kernel
    # reads half the HBM bytes and casts per 128-lane slab in VMEM.
    # NOTE: no jnp.pad here -- unaligned vocab/rows are handled in-kernel
    # (tail mask) / by Pallas' masked OOB writes on the trailing row block.
    full2 = full_score.reshape(num_rows, vocab)

    itemsize = jnp.dtype(full2.dtype).itemsize
    auto_rt, auto_vt, vmem_limit = _choose_tiles(num_rows, vocab, itemsize)
    row_tile = auto_rt if row_tile is None else row_tile
    v_tile = auto_vt if v_tile is None else v_tile
    assert row_tile % 8 == 0 and v_tile % 128 == 0

    num_k = pl.cdiv(vocab, v_tile)
    grid = (pl.cdiv(num_rows, row_tile), num_k)
    multi_buffer = (num_k > 2) and (row_tile * v_tile * itemsize < 2 * 1024 * 1024)

    kernel = functools.partial(_full_softmax_kernel, vocab=vocab, num_k=num_k)

    lse_lane = pl.pallas_call(
        kernel,
        out_shape=jax.ShapeDtypeStruct((num_rows, 128), jnp.float32),
        grid_spec=pltpu.PrefetchScalarGridSpec(
            num_scalar_prefetch=0,
            grid=grid,
            in_specs=[_full_in_spec(row_tile, v_tile, multi_buffer)],
            out_specs=pl.BlockSpec((row_tile, 128), lambda i, k: (i, 0)),
            scratch_shapes=[
                pltpu.VMEM((row_tile, 128), jnp.float32),   # running per-lane max
                pltpu.VMEM((row_tile, 128), jnp.float32),   # running per-lane sum
            ],
        ),
        compiler_params=pltpu.CompilerParams(
            dimension_semantics=("parallel", "arbitrary"),
            vmem_limit_bytes=vmem_limit,
        ),
    )(full2)

    # Tiny finishing math in XLA: 128-lane combine, pos subtraction, nan_to_num,
    # per-batch mean.  lse_lane handles +/-inf/nan exactly like torch.logsumexp
    # (untouched lanes are -inf, +inf rows become +inf, nan propagates).
    lse = jax.scipy.special.logsumexp(lse_lane, axis=-1).reshape(tuple(batch_dims))
    ps = pos_score.astype(jnp.float32)
    out = jnp.nan_to_num(lse - ps, posinf=0.0)    # nan->0, +inf->0, -inf->f32 min
    notpad = jnp.sum(jnp.logical_not(jnp.isinf(ps)), axis=-1).astype(jnp.float32)
    # Note: if an entire batch row of pos_score is padded (-inf), notpad == 0
    # and the result is inf/nan -- identical to the PyTorch reference.
    return jnp.mean(jnp.sum(out, axis=-1) / notpad)


def _reference_loss(pos_score, full_score):
    # Pure-JAX reference mirroring the PyTorch module (math in f32).
    fs = full_score.astype(jnp.float32)
    ps = pos_score.astype(jnp.float32)
    lse = jax.scipy.special.logsumexp(fs, axis=-1)
    out = jnp.nan_to_num(lse - ps, posinf=0.0)
    notpad = jnp.sum(jnp.logical_not(jnp.isinf(ps)), axis=-1).astype(jnp.float32)
    return jnp.mean(jnp.sum(out, axis=-1) / notpad)


if __name__ == "__main__":
    key = jax.random.PRNGKey(0)
    k1, k2 = jax.random.split(key)

    # Deliberately non-aligned shapes (rows=14 not %8, vocab=300 not %128) so the
    # pad-free tail-mask + partial-trailing-block paths are exercised.
    B, S, V = 2, 7, 300
    full_score = jax.random.normal(k1, (B, S, V), dtype=jnp.float32).astype(jnp.bfloat16)
    pos_score = jax.random.normal(k2, (B, S), dtype=jnp.float32)
    # mark a couple of padded positions in the second batch row with -inf,
    # and make the last padded position's vocab row entirely -inf as well.
    pos_score = pos_score.at[1, -2:].set(-jnp.inf)
    full_score = full_score.at[1, -1, :].set(-jnp.inf)

    ref = _reference_loss(pos_score, full_score)

    # default (auto-sized, generation-aware) tiling
    loss = jax.block_until_ready(full_softmax_loss(pos_score, full_score))
    assert jnp.allclose(loss, ref, rtol=2e-5, atol=2e-5), (loss, ref)

    # force small tiles: exercises the multi-V-chunk online-logsumexp path and
    # the Buffered(3) small-block pipelining.
    loss_tiled = jax.block_until_ready(
        full_softmax_loss(pos_score, full_score, row_tile=8, v_tile=128))
    assert jnp.allclose(loss_tiled, ref, rtol=2e-5, atol=2e-5), (loss_tiled, ref)

    # aligned-shape case (no tail mask emitted at trace time).
    B2, S2, V2 = 2, 8, 384
    fs2 = jax.random.normal(k1, (B2, S2, V2), dtype=jnp.float32).astype(jnp.bfloat16)
    ps2 = jax.random.normal(k2, (B2, S2), dtype=jnp.float32)
    ref2 = _reference_loss(ps2, fs2)
    loss2 = jax.block_until_ready(full_softmax_loss(ps2, fs2))
    assert jnp.allclose(loss2, ref2, rtol=2e-5, atol=2e-5), (loss2, ref2)

    print("KERNEL_OK")
</pallas_src>

<mosaic_0001>
module attributes {stable_mosaic.version = 11 : i64} {
  func.func @_full_softmax_kernel(%arg0: i32, %arg1: i32, %arg2: memref<8x384xbf16, #tpu.memory_space<vmem>>, %arg3: memref<8x128xf32, #tpu.memory_space<vmem>>, %arg4: memref<8x128xf32, #tpu.memory_space<vmem>>, %arg5: memref<8x128xf32, #tpu.memory_space<vmem>>) attributes {dimension_semantics = [#tpu.dimension_semantics<parallel>, #tpu.dimension_semantics<arbitrary>], iteration_bounds = array<i64: 2, 1>, scalar_prefetch = 0 : i64, scratch_operands = 2 : i64, tpu.core_type = #tpu.core_type<tc>, window_params = [{transform_indices = @transform_0, window_bounds = array<i64: 8, 384>}, {transform_indices = @transform_1, window_bounds = array<i64: 8, 128>}]} {
    %c0_i32 = arith.constant 0 : i32
    %0 = arith.cmpi eq, %arg1, %c0_i32 : i32
    %1 = arith.extui %0 : i1 to i32
    %c0_i32_0 = arith.constant 0 : i32
    %2 = arith.cmpi ne, %1, %c0_i32_0 : i32
    scf.if %2 {
      %cst_28 = arith.constant -3.40282347E+38 : f32
      %63 = vector.broadcast %cst_28 : f32 to vector<8x128xf32>
      %c0_29 = arith.constant 0 : index
      %c0_30 = arith.constant 0 : index
      %64 = vector.load %arg4[%c0_29, %c0_30] : memref<8x128xf32, #tpu.memory_space<vmem>>, vector<8x128xf32>
      tpu.vector_store %arg4[%c0_29, %c0_30], %63 {strides = array<i32>} : memref<8x128xf32, #tpu.memory_space<vmem>>, vector<8x128xf32>,
      %cst_31 = arith.constant 0.000000e+00 : f32
      %65 = vector.broadcast %cst_31 : f32 to vector<8x128xf32>
      %c0_32 = arith.constant 0 : index
      %c0_33 = arith.constant 0 : index
      %66 = vector.load %arg5[%c0_32, %c0_33] : memref<8x128xf32, #tpu.memory_space<vmem>>, vector<8x128xf32>
      tpu.vector_store %arg5[%c0_32, %c0_33], %65 {strides = array<i32>} : memref<8x128xf32, #tpu.memory_space<vmem>>, vector<8x128xf32>,
    } else {
    }
    %3 = tpu.iota {dimensions = array<i32: 1>} : vector<8x128xi32>
    %c384_i32 = arith.constant 384 : i32
    %4 = arith.muli %arg1, %c384_i32 : i32
    %c0 = arith.constant 0 : index
    %c0_1 = arith.constant 0 : index
    %5 = vector.load %arg4[%c0, %c0_1] : memref<8x128xf32, #tpu.memory_space<vmem>>, vector<8x128xf32>
    %c0_2 = arith.constant 0 : index
    %c0_3 = arith.constant 0 : index
    %6 = vector.load %arg2[%c0_2, %c0_3] : memref<8x384xbf16, #tpu.memory_space<vmem>>, vector<8x128xbf16>
    %7 = arith.extf %6 : vector<8x128xbf16> to vector<8x128xf32>
    %8 = arith.maximumf %5, %7 : vector<8x128xf32>
    %c0_4 = arith.constant 0 : index
    %c128 = arith.constant 128 : index
    %9 = vector.load %arg2[%c0_4, %c128] : memref<8x384xbf16, #tpu.memory_space<vmem>>, vector<8x128xbf16>
    %10 = arith.extf %9 : vector<8x128xbf16> to vector<8x128xf32>
    %11 = arith.maximumf %8, %10 : vector<8x128xf32>
    %c0_5 = arith.constant 0 : index
    %c256 = arith.constant 256 : index
    %12 = vector.load %arg2[%c0_5, %c256] : memref<8x384xbf16, #tpu.memory_space<vmem>>, vector<8x128xbf16>
    %13 = arith.extf %12 : vector<8x128xbf16> to vector<8x128xf32>
    %c256_i32 = arith.constant 256 : i32
    %14 = arith.addi %4, %c256_i32 : i32
    %15 = vector.broadcast %14 : i32 to vector<8x128xi32>
    %16 = arith.addi %3, %15 : vector<8x128xi32>
    %c300_i32 = arith.constant 300 : i32
    %17 = vector.broadcast %c300_i32 : i32 to vector<8x128xi32>
    %18 = arith.cmpi slt, %16, %17 : vector<8x128xi32>
    %cst = arith.constant 0xFF800000 : f32
    %19 = vector.broadcast %cst : f32 to vector<8x128xf32>
    %20 = arith.select %18, %13, %19 : vector<8x128xi1>, vector<8x128xf32>
    %21 = arith.maximumf %11, %20 : vector<8x128xf32>
    %22 = tpu.weird %21 : vector<8x128xf32> -> vector<8x128xi1>
    %cst_6 = arith.constant dense<true> : vector<8x128xi1>
    %23 = arith.xori %22, %cst_6 : vector<8x128xi1>
    %cst_7 = arith.constant 0.000000e+00 : f32
    %24 = vector.broadcast %cst_7 : f32 to vector<8x128xf32>
    %25 = arith.select %23, %21, %24 : vector<8x128xi1>, vector<8x128xf32>
    %26 = tpu.weird %5 : vector<8x128xf32> -> vector<8x128xi1>
    %cst_8 = arith.constant dense<true> : vector<8x128xi1>
    %27 = arith.xori %26, %cst_8 : vector<8x128xi1>
    %cst_9 = arith.constant 0.000000e+00 : f32
    %28 = vector.broadcast %cst_9 : f32 to vector<8x128xf32>
    %29 = arith.select %27, %5, %28 : vector<8x128xi1>, vector<8x128xf32>
    %30 = arith.subf %29, %25 : vector<8x128xf32>
    %31 = math.exp %30 : vector<8x128xf32>
    %cst_10 = arith.constant 0.000000e+00 : f32
    %32 = vector.broadcast %cst_10 : f32 to vector<8x128xf32>
    %c0_11 = arith.constant 0 : index
    %c0_12 = arith.constant 0 : index
    %33 = vector.load %arg2[%c0_11, %c0_12] : memref<8x384xbf16, #tpu.memory_space<vmem>>, vector<8x128xbf16>
    %34 = arith.extf %33 : vector<8x128xbf16> to vector<8x128xf32>
    %35 = arith.subf %34, %25 : vector<8x128xf32>
    %36 = math.exp %35 : vector<8x128xf32>
    %37 = arith.addf %32, %36 : vector<8x128xf32>
    %c0_13 = arith.constant 0 : index
    %c128_14 = arith.constant 128 : index
    %38 = vector.load %arg2[%c0_13, %c128_14] : memref<8x384xbf16, #tpu.memory_space<vmem>>, vector<8x128xbf16>
    %39 = arith.extf %38 : vector<8x128xbf16> to vector<8x128xf32>
    %40 = arith.subf %39, %25 : vector<8x128xf32>
    %41 = math.exp %40 : vector<8x128xf32>
    %42 = arith.addf %37, %41 : vector<8x128xf32>
    %c0_15 = arith.constant 0 : index
    %c256_16 = arith.constant 256 : index
    %43 = vector.load %arg2[%c0_15, %c256_16] : memref<8x384xbf16, #tpu.memory_space<vmem>>, vector<8x128xbf16>
    %44 = arith.extf %43 : vector<8x128xbf16> to vector<8x128xf32>
    %c256_i32_17 = arith.constant 256 : i32
    %45 = arith.addi %4, %c256_i32_17 : i32
    %46 = vector.broadcast %45 : i32 to vector<8x128xi32>
    %47 = arith.addi %3, %46 : vector<8x128xi32>
    %c300_i32_18 = arith.constant 300 : i32
    %48 = vector.broadcast %c300_i32_18 : i32 to vector<8x128xi32>
    %49 = arith.cmpi slt, %47, %48 : vector<8x128xi32>
    %cst_19 = arith.constant 0xFF800000 : f32
    %50 = vector.broadcast %cst_19 : f32 to vector<8x128xf32>
    %51 = arith.select %49, %44, %50 : vector<8x128xi1>, vector<8x128xf32>
    %52 = arith.subf %51, %25 : vector<8x128xf32>
    %53 = math.exp %52 : vector<8x128xf32>
    %54 = arith.addf %42, %53 : vector<8x128xf32>
    %c0_20 = arith.constant 0 : index
    %c0_21 = arith.constant 0 : index
    %55 = vector.load %arg5[%c0_20, %c0_21] : memref<8x128xf32, #tpu.memory_space<vmem>>, vector<8x128xf32>
    %56 = arith.mulf %55, %31 : vector<8x128xf32>
    %57 = arith.addf %56, %54 : vector<8x128xf32>
    %c0_22 = arith.constant 0 : index
    %c0_23 = arith.constant 0 : index
    %58 = vector.load %arg5[%c0_22, %c0_23] : memref<8x128xf32, #tpu.memory_space<vmem>>, vector<8x128xf32>
    tpu.vector_store %arg5[%c0_22, %c0_23], %57 {strides = array<i32>} : memref<8x128xf32, #tpu.memory_space<vmem>>, vector<8x128xf32>,
    %c0_24 = arith.constant 0 : index
    %c0_25 = arith.constant 0 : index
    %59 = vector.load %arg4[%c0_24, %c0_25] : memref<8x128xf32, #tpu.memory_space<vmem>>, vector<8x128xf32>
    tpu.vector_store %arg4[%c0_24, %c0_25], %21 {strides = array<i32>} : memref<8x128xf32, #tpu.memory_space<vmem>>, vector<8x128xf32>,
    %c0_i32_26 = arith.constant 0 : i32
    %60 = arith.cmpi eq, %arg1, %c0_i32_26 : i32
    %61 = arith.extui %60 : i1 to i32
    %c0_i32_27 = arith.constant 0 : i32
    %62 = arith.cmpi ne, %61, %c0_i32_27 : i32
    scf.if %62 {
      %c0_28 = arith.constant 0 : index
      %c0_29 = arith.constant 0 : index
      %63 = vector.load %arg4[%c0_28, %c0_29] : memref<8x128xf32, #tpu.memory_space<vmem>>, vector<8x128xf32>
      %64 = tpu.weird %63 : vector<8x128xf32> -> vector<8x128xi1>
      %cst_30 = arith.constant dense<true> : vector<8x128xi1>
      %65 = arith.xori %64, %cst_30 : vector<8x128xi1>
      %cst_31 = arith.constant 0.000000e+00 : f32
      %66 = vector.broadcast %cst_31 : f32 to vector<8x128xf32>
      %67 = arith.select %65, %63, %66 : vector<8x128xi1>, vector<8x128xf32>
      %c0_32 = arith.constant 0 : index
      %c0_33 = arith.constant 0 : index
      %68 = vector.load %arg5[%c0_32, %c0_33] : memref<8x128xf32, #tpu.memory_space<vmem>>, vector<8x128xf32>
      %69 = math.log %68 : vector<8x128xf32>
      %70 = arith.addf %67, %69 : vector<8x128xf32>
      %c0_34 = arith.constant 0 : index
      %c0_35 = arith.constant 0 : index
      %71 = vector.load %arg3[%c0_34, %c0_35] : memref<8x128xf32, #tpu.memory_space<vmem>>, vector<8x128xf32>
      tpu.vector_store %arg3[%c0_34, %c0_35], %70 {strides = array<i32>} : memref<8x128xf32, #tpu.memory_space<vmem>>, vector<8x128xf32>,
    } else {
    }
    return
  }
  func.func @transform_0(%arg0: i32, %arg1: i32) -> (i32, i32) {
    %c0_i32 = arith.constant 0 : i32
    return %arg0, %arg1 : i32, i32
  }
  func.func @transform_1(%arg0: i32, %arg1: i32) -> (i32, i32) {
    %c0_i32 = arith.constant 0 : i32
    %c0_i32_0 = arith.constant 0 : i32
    return %arg0, %c0_i32 : i32, i32
  }
}

</mosaic_0001>

<llo_original>
// kernel: tpu_custom_call.1
$region0: #{tpu_custom_call.1}
  #allocation0 [shape = 'u32[]', space=smem, size = 0x4, offset = 0x4, fixed_abs, tag = 'smem constant byte address 0x4 - core index']
  #allocation1 [shape = 'u32[144,128]{1,0:T(1,128)}', space=vmem, size = 0x12000, scoped, tag = 'internal scratch']
  #allocation2 [shape = 'f32[8,128]{1,0:T(8,128)}', space=vmem, size = 0x1000, scoped, tag = 'scratch operand']
  #allocation3 [shape = 'f32[8,128]{1,0:T(8,128)}', space=vmem, size = 0x1000, scoped, tag = 'scratch operand']
  %s0 = inlined_call_operand.hbm [shape: bf16[14,300], index: 0, kind: input, shape index: {}]
  %s1 = inlined_call_operand.hbm [shape: f32[14,128], index: 1, kind: output, shape index: {}]
  %s2 = sld [smem:[#allocation0]]
  $region49: #{tpu_custom_call.1} parent=0
    _
  %s4 = ssub.s32 1, %s2
  %s5 = scalar_select 0, %s4, %s2
  $region1: #{tpu_custom_call.1} parent=0
    #allocation4 [shape = 'u8[12288]{0}', space=vmem, size = 0x3000, scoped, tag = 'input window, operand 0']
    #allocation5 [shape = 's32[2]{0}', space=sflag, size = 0x8, scoped, tag = 'scoped memory for tpu_custom_call.1']
    #allocation6 [shape = 's32[2]{0}', space=sflag, size = 0x8, scoped, tag = 'scoped memory for tpu_custom_call.1']
    #allocation7 [shape = 'u8[8192]{0}', space=vmem, size = 0x2000, scoped, tag = 'output window, operand 0']
    %6 = vsyncpa [#allocation5], 0
    %s7 = scalar_lea.sflag [#allocation5], 1
    %8 = vsyncpa %s7, 0
    %9 = vsyncpa [#allocation6], 0
    %s10 = scalar_lea.sflag [#allocation6], 1
    %11 = vsyncpa %s10, 0
    loop: start=0, step=1, limit=4
    $region2: #{tpu_custom_call.1} parent=1 // loop_pre_header
      _
    $region3: #{tpu_custom_call.1} parent=1 // loop_header
      %s13 = sphi 0, %s17
      %p14 = scmp.ge.s32.totalorder %s13, 4
      %s20 = sphi 0, %s32
      %s21 = sphi 0, %s28
      %s22 = sphi 0, %s20
      %s23 = sphi 0, %s21
      %s24 = sphi 0, %s22
      %s25 = sphi 0, %s23
      %s37 = sphi 0, %s39
      %s40 = sphi 0, %s37
      %s41 = sphi 0, %s40
      %s57 = sphi 0, %s41
      %s63 = sphi 0, %s65
      %s66 = sphi 0, %s63
      %s67 = sphi 0, %s66
      %s83 = sphi 0, %s67
    $region4: #{tpu_custom_call.1} parent=1 // loop_header_branch
      %16 = sbr.rel (%p14) target = $region8
    $region5: #{tpu_custom_call.1} parent=1 // loop_body
      %s18 = ssub.s32 %s13, 1
      %s19 = ssub.s32 %s13, 2
      %s26 = sadd.s32 1, %s21
      %p27 = scmp.ge.s32.totalorder %s26, 1
      %s28 = scalar_select %p27, 0, %s26
      %s29 = sadd.s32 1, %s20
      %s30 = scalar_select %p27, %s29, %s20
      %p31 = scmp.ge.s32.totalorder %s30, 2
      %s32 = scalar_select %p31, 0, %s30
      %s33 = ssub.s32 %s20, %s32
      %s34 = ssub.s32 %s21, %s28
      %s35 = sor.u32 %s33, %s34
      %p36 = scmp.eq.s32.totalorder %s35, 0
      %s38 = sadd.s32 %s37, 1
      %s39 = scalar_select %p36, %s37, %s38
      %p42 = pneg %p36
      %p43 = scmp.eq.s32.totalorder %s13, 1
      %p44 = por %p42, %p43
      %p45 = scmp.ne.s32.totalorder %s37, %s40
      %p46 = scmp.eq.s32.totalorder %s13, 0
      %p47 = por %p45, %p46
      %p48 = scmp.ne.s32.totalorder %s37, %s40
      %p49 = scmp.eq.s32.totalorder %s18, 1
      %p50 = por %p48, %p49
      %p51 = scmp.ne.s32.totalorder %s40, %s41
      %p52 = scmp.eq.s32.totalorder %s18, 0
      %p53 = por %p51, %p52
      %p54 = scmp.ne.s32.totalorder %s40, %s41
      %p55 = scmp.eq.s32.totalorder %s19, 1
      %p56 = por %p54, %p55
      %p58 = scmp.ne.s32.totalorder %s41, %s57
      %p59 = scmp.eq.s32.totalorder %s19, 0
      %p60 = por %p58, %p59
      %s61 = ssub.s32 %s20, %s32
      %p62 = scmp.eq.s32.totalorder %s61, 0
      %s64 = sadd.s32 %s63, 1
      %s65 = scalar_select %p62, %s63, %s64
      %p68 = pneg %p62
      %p69 = scmp.eq.s32.totalorder %s13, 1
      %p70 = por %p68, %p69
      %p71 = scmp.ne.s32.totalorder %s63, %s66
      %p72 = scmp.eq.s32.totalorder %s13, 0
      %p73 = por %p71, %p72
      %p74 = scmp.ne.s32.totalorder %s63, %s66
      %p75 = scmp.eq.s32.totalorder %s18, 1
      %p76 = por %p74, %p75
      %p77 = scmp.ne.s32.totalorder %s66, %s67
      %p78 = scmp.eq.s32.totalorder %s18, 0
      %p79 = por %p77, %p78
      %p80 = scmp.ne.s32.totalorder %s66, %s67
      %p81 = scmp.eq.s32.totalorder %s19, 1
      %p82 = por %p80, %p81
      %p84 = scmp.ne.s32.totalorder %s67, %s83
      %p85 = scmp.eq.s32.totalorder %s19, 0
      %p86 = por %p84, %p85
      %p87 = scmp.le.s32.totalorder 1, %s13
      %p88 = scmp.lt.s32.totalorder %s13, 3
      %p89 = pnand %p87, %p88
      %p90 = pneg %p89
      // Predicated region
      $region9: #{tpu_custom_call.1} parent=5 // pred_check
        _
      $region10: #{tpu_custom_call.1} parent=5 // pred_check_branch
        %92 = sbr.rel (%p89) target = $region12
      $region11: #{tpu_custom_call.1} parent=5 // pred_region
        %s93 = ssub.s32 %s13, 1
      $region12: #{tpu_custom_call.1} parent=5 // pred_fallthru
        _
      %p94 = scmp.lt.s32.totalorder %s13, 2
      // Predicated region
      $region13: #{tpu_custom_call.1} parent=5 // pred_check
        %p95 = pneg %p94
      $region14: #{tpu_custom_call.1} parent=5 // pred_check_branch
        %97 = sbr.rel (%p95) target = $region16
      $region15: #{tpu_custom_call.1} parent=5 // pred_region
        // Predicated region
        $region17: #{tpu_custom_call.1} parent=15 // pred_check
          %p98 = pneg %p47
        $region18: #{tpu_custom_call.1} parent=15 // pred_check_branch
          %100 = sbr.rel (%p98) target = $region20
        $region19: #{tpu_custom_call.1} parent=15 // pred_region
          %s101 = sand.u32 %s37, 1
          %s102 = scalar_lea.sflag [#allocation5], %s101
          %s103 = sand.u32 %s37, 1
          %s104 = smul.addr %s103, 12
          %s105 = scalar_lea.vmem [#allocation4], %s104
          %s106 = smul.u32 3, %s21
          %s108 = ssub.s32 192, 192
          %109 = vsyncadd %s102, %s108
          %s110 = smul.addr %s20, 3
          %s111 = sadd.s32 %s106, %s110
          %s112 = smul.addr %s111, 64
          %s113 = scalar_lea.hbm %s0, %s112
          %s115 = sshll.u32 %s105, 4
          %s116 = int_to_ptr.vmem [resolvable:$true] %s115
          %118 = dma.hbm_to_vmem [thread:$0]  %s113, 192, %s116, %s102
        $region20: #{tpu_custom_call.1} parent=15 // pred_fallthru
          _
      $region16: #{tpu_custom_call.1} parent=5 // pred_fallthru
        _
      %p119 = scmp.le.s32.totalorder 1, %s13
      %p120 = scmp.lt.s32.totalorder %s13, 3
      %p121 = pnand %p119, %p120
      %p122 = pneg %p121
      // Predicated region
      $region21: #{tpu_custom_call.1} parent=5 // pred_check
        _
      $region22: #{tpu_custom_call.1} parent=5 // pred_check_branch
        %124 = sbr.rel (%p121) target = $region24
      $region23: #{tpu_custom_call.1} parent=5 // pred_region
        %s125 = ssub.s32 %s13, 1
        %s126 = sand.u32 %s40, 1
        %s127 = scalar_lea.sflag [#allocation5], %s126
        %s128 = sand.u32 %s40, 1
        %s129 = smul.addr %s128, 12
        %s130 = scalar_lea.vmem [#allocation4], %s129
        // Predicated region
        $region25: #{tpu_custom_call.1} parent=23 // pred_check
          %p131 = pneg %p53
        $region26: #{tpu_custom_call.1} parent=23 // pred_check_branch
          %133 = sbr.rel (%p131) target = $region28
        $region27: #{tpu_custom_call.1} parent=23 // pred_region
          %134 = dma.done %s127, 192
        $region28: #{tpu_custom_call.1} parent=23 // pred_fallthru
          _
        %s135 = sand.u32 %s40, 1
        %s136 = scalar_lea.sflag [#allocation5], %s135
        %s137 = sand.u32 %s40, 1
        %s138 = smul.addr %s137, 12
        %s139 = scalar_lea.vmem [#allocation4], %s138
        %p140 = pneg %p53
        %p141 = pneg %p50
        %p142 = pneg %p79
        %p143 = pneg %p76
        %s144 = sand.u32 %s66, 1
        %s145 = scalar_lea.sflag [#allocation6], %s144
        %s146 = sand.u32 %s66, 1
        %s147 = smul.addr %s146, 8
        %s148 = scalar_lea.vmem [#allocation7], %s147
        %s149 = smul.u32 3, %s23
        %p150 = scmp.eq.s32.totalorder %s23, 0
        // Predicated region
        $region29: #{tpu_custom_call.1} parent=23 // pred_check
          %p151 = pneg %p150
        $region30: #{tpu_custom_call.1} parent=23 // pred_check_branch
          %153 = sbr.rel (%p151) target = $region32
        $region31: #{tpu_custom_call.1} parent=23 // pred_region
          %154 = vst [vmem:[#allocation2] sm:$0xff] -3.4028235e+38
          %155 = vst [vmem:[#allocation3] sm:$0xff] 0.0
        $region32: #{tpu_custom_call.1} parent=23 // pred_fallthru
          _
        %v156 = vlaneseq
        %v157 = vand.u32 %v156, 127
        %s158 = smul.u32 %s23, 384
        %v159 = vld [vmem:[#allocation2] sm:$0xff]
        %v160 = vld [vmem:[%s130] sm:$0xf]
        %v161 = vunpack.c.l.bf16 %v160
        %v162 = vmax.f32 %v159, %v161
        %v163 = vld [vmem:[%s130 + $0x4] sm:$0xf]
        %v164 = vunpack.c.l.bf16 %v163
        %v165 = vmax.f32 %v162, %v164
        %v166 = vld [vmem:[%s130 + $0x8] sm:$0xf]
        %v167 = vunpack.c.l.bf16 %v166
        %s168 = sadd.s32 %s158, 256
        %v169 = vstv %s168
        %v170 = vadd.s32 %v157, %v169
        %vm171 = vcmp.lt.s32.totalorder %v170, 300
        %v172 = vsel %vm171, %v167, -inf
        %v173 = vmax.f32 %v165, %v172
        %vm174 = vweird.f32 %v173
        %vm175 = vmxor %vm174, 1
        %v176 = vsel %vm175, %v173, 0.0
        %vm177 = vweird.f32 %v159
        %vm178 = vmxor %vm177, 1
        %v179 = vsel %vm178, %v159, 0.0
        %v180 = vsub.f32 %v179, %v176
        %v181 = vmul.f32 %v180, 1.442695
        %v182 = vpow.pop %v181
        %v183 = vsub.f32 %v161, %v176
        %v184 = vmul.f32 %v183, 1.442695
        %v185 = vpow.pop %v184
        %v186 = vadd.f32 %v185, 0.0
        %v187 = vsub.f32 %v164, %v176
        %v188 = vmul.f32 %v187, 1.442695
        %v189 = vpow.pop %v188
        %v190 = vadd.f32 %v186, %v189
        %v191 = vsub.f32 %v172, %v176
        %v192 = vmul.f32 %v191, 1.442695
        %v193 = vpow.pop %v192
        %v194 = vadd.f32 %v190, %v193
        %v195 = vld [vmem:[#allocation3] sm:$0xff]
        %v196 = vmul.f32 %v195, %v182
        %v197 = vadd.f32 %v196, %v194
        %198 = vst [vmem:[#allocation3] sm:$0xff] %v197
        %199 = vst [vmem:[#allocation2] sm:$0xff] %v173
        // Predicated region
        $region33: #{tpu_custom_call.1} parent=23 // pred_check
          %p200 = pneg %p150
        $region34: #{tpu_custom_call.1} parent=23 // pred_check_branch
          %202 = sbr.rel (%p200) target = $region36
        $region35: #{tpu_custom_call.1} parent=23 // pred_region
          %v203 = vld [vmem:[#allocation2] sm:$0xff]
          %vm204 = vweird.f32 %v203
          %vm205 = vmxor %vm204, 1
          %v206 = vsel %vm205, %v203, 0.0
          %v207 = vld [vmem:[#allocation3] sm:$0xff]
          %v208 = vlog2.pop %v207
          %v209 = vmul.f32 %v208, 0.6931472
          %v210 = vadd.f32 %v206, %v209
          %211 = vst [vmem:[%s148] sm:$0xff] %v210
        $region36: #{tpu_custom_call.1} parent=23 // pred_fallthru
          _
        %s212 = sand.u32 %s66, 1
        %s213 = scalar_lea.sflag [#allocation6], %s212
        %s214 = sand.u32 %s66, 1
        %s215 = smul.addr %s214, 8
        %s216 = scalar_lea.vmem [#allocation7], %s215
        // Predicated region
        $region37: #{tpu_custom_call.1} parent=23 // pred_check
          %p217 = pneg %p76
        $region38: #{tpu_custom_call.1} parent=23 // pred_check_branch
          %219 = sbr.rel (%p217) target = $region40
        $region39: #{tpu_custom_call.1} parent=23 // pred_region
          %s221 = ssub.s32 128, 128
          %222 = vsyncadd %s213, %s221
          %s223 = smul.addr %s22, 128
          %s224 = scalar_lea.hbm %s1, %s223
          %s226 = sshll.u32 %s216, 4
          %s227 = int_to_ptr.vmem [resolvable:$true] %s226
          %229 = dma.vmem_to_hbm [thread:$0]  %s227, 128, %s224, %s213
        $region40: #{tpu_custom_call.1} parent=23 // pred_fallthru
          _
      $region24: #{tpu_custom_call.1} parent=5 // pred_fallthru
        _
      %p230 = scmp.le.s32.totalorder 2, %s13
      // Predicated region
      $region41: #{tpu_custom_call.1} parent=5 // pred_check
        %p231 = pneg %p230
      $region42: #{tpu_custom_call.1} parent=5 // pred_check_branch
        %233 = sbr.rel (%p231) target = $region44
      $region43: #{tpu_custom_call.1} parent=5 // pred_region
        %s234 = ssub.s32 %s13, 2
        // Predicated region
        $region45: #{tpu_custom_call.1} parent=43 // pred_check
          %p235 = pneg %p82
        $region46: #{tpu_custom_call.1} parent=43 // pred_check_branch
          %237 = sbr.rel (%p235) target = $region48
        $region47: #{tpu_custom_call.1} parent=43 // pred_region
          %s238 = sand.u32 %s67, 1
          %s239 = scalar_lea.sflag [#allocation6], %s238
          %s240 = sand.u32 %s67, 1
          %s241 = smul.addr %s240, 8
          %s242 = scalar_lea.vmem [#allocation7], %s241
          %243 = dma.done %s239, 128
        $region48: #{tpu_custom_call.1} parent=43 // pred_fallthru
          _
      $region44: #{tpu_custom_call.1} parent=5 // pred_fallthru
        _
    $region6: #{tpu_custom_call.1} parent=1 // loop_footer
      %s17 = sadd.s32 1, %s13
    $region7: #{tpu_custom_call.1} parent=1 // loop_footer_branch
      %12 = sbr.rel target = $region3
    $region8: #{tpu_custom_call.1} parent=1 // loop_exit
      _
    %244 = vsyncpa [#allocation5], 1
    %s245 = scalar_lea.sflag [#allocation5], 1
    %246 = vsyncpa %s245, 1
    %247 = vsyncpa [#allocation6], 1
    %s248 = scalar_lea.sflag [#allocation6], 1
    %249 = vsyncpa %s248, 1

</llo_original>
